<compile_context>
chip_gen: v7x
topology: tpu7x:2x2x1
jax: 0.10.0
libtpu: 0.0.40
codegen_flags: <defaults>
</compile_context>

<pallas_src>
import numpy as np
import jax
import jax.numpy as jnp
from jax.experimental import pallas as pl
from jax.experimental.pallas import tpu as pltpu


# ----------------------------- "cfg" constants ------------------------------
THRESHOLD_PREDICT_CONF = 0.30
THRESHOLD_PREDICT_NMS = 0.50
PTOPK = 10
NUM_CLASSES = 4

LANES = 128  # TPU lane width; anchors are folded onto (sublane-rows, 128 lanes)


def _choose_row_tile(R, B):
    """Pick the sublane-row tile S and the padded row count R_pad.

    Large tiles amortize the ~0.35 us per-grid-step pipeline overhead (this
    kernel is purely HBM-bound: no MXU, trivial VPU/EUP work).  We also keep
    at least 2 total grid programs across (B, R_pad // S) so a two-TC chip
    (v7x) gets work on both cores under the "parallel" dimension semantics.
    Per-step footprint at S=512 is ~(1+C)*512*128*4 B in + 512*128*4 B out,
    double-buffered well under any generation's VMEM limit.
    """
    r8 = ((R + 7) // 8) * 8                 # sublane granularity
    cap = 512                               # row-tile cap
    tiles = max(pl.cdiv(r8, cap), 1)
    if B * tiles < 2 and r8 > 8:            # ensure >=2 programs for megacore
        tiles = 2
    S = ((pl.cdiv(r8, tiles) + 7) // 8) * 8
    R_pad = tiles * S
    return S, R_pad


# ------------------------------ Pallas kernel -------------------------------
def _score_kernel(pconf_ref, pcls_ref, pscores_ref):
    # pconf_ref : (S, 128)      raw objectness logits
    # pcls_ref  : (C, S, 128)   raw class logits
    #
    # sigmoid is strictly monotone and positive, so
    #   max_c sigmoid(conf) * sigmoid(cls_c) == sigmoid(conf) * sigmoid(max_c cls_c)
    # -> class reduction on RAW logits (C-1 elementwise maxima on the VPU,
    #    the leading dim is not a vreg axis) and only 2 EUP sigmoids / anchor.
    best = jnp.max(pcls_ref[...].astype(jnp.float32), axis=0)        # (S, 128)
    conf = jax.nn.sigmoid(pconf_ref[...].astype(jnp.float32))        # (S, 128)
    pscores_ref[...] = conf * jax.nn.sigmoid(best)


def predict_scores(pconf, pcls):
    """Dense per-anchor score stage: pscores = sigmoid(conf) * max_c sigmoid(cls)."""
    B, N = pconf.shape
    C = pcls.shape[1]

    R = pl.cdiv(N, LANES)
    S, R_pad = _choose_row_tile(R, B)
    N_pad = R_pad * LANES

    if N_pad != N:
        pad = N_pad - N
        # -1e9 logits -> sigmoid == 0 -> score 0 -> below threshold, never kept
        pconf = jnp.pad(pconf, ((0, 0), (0, pad)), constant_values=-1e9)
        pcls = jnp.pad(pcls, ((0, 0), (0, 0), (0, pad)), constant_values=-1e9)

    # Fold anchors onto (sublane, lane) so vregs and stores are dense.
    pconf_r = pconf.reshape(B, R_pad, LANES)
    pcls_r = pcls.reshape(B, C, R_pad, LANES)

    itemsize = np.dtype(pconf_r.dtype).itemsize
    cost = pl.CostEstimate(
        flops=B * N_pad * (C + 1),
        transcendentals=2 * B * N_pad,
        bytes_accessed=B * N_pad * (1 + C) * itemsize + B * N_pad * 4,
    )

    pscores = pl.pallas_call(
        _score_kernel,
        out_shape=jax.ShapeDtypeStruct((B, R_pad, LANES), jnp.float32),
        grid_spec=pltpu.PrefetchScalarGridSpec(
            num_scalar_prefetch=0,
            grid=(B, R_pad // S),
            in_specs=[
                pl.BlockSpec((None, S, LANES), lambda b, r: (b, r, 0)),
                pl.BlockSpec((None, C, S, LANES), lambda b, r: (b, 0, r, 0)),
            ],
            out_specs=pl.BlockSpec((None, S, LANES), lambda b, r: (b, r, 0)),
        ),
        compiler_params=pltpu.CompilerParams(
            dimension_semantics=("parallel", "parallel")),
        cost_estimate=cost,
    )(pconf_r, pcls_r)

    return pscores.reshape(B, N_pad)[:, :N]


# --------------------------- plain-Python NMS glue ---------------------------
# TODO(synk): label_nms is greedy, data-dependent control flow with dynamic
# output shapes; kept in plain Python glue rather than faking it in Pallas.
def _iou_ltrb(a, b):
    lt = np.maximum(a[:2], b[:2])
    rb = np.minimum(a[2:], b[2:])
    wh = np.clip(rb - lt, 0.0, None)
    inter = wh[0] * wh[1]
    area_a = max(a[2] - a[0], 0.0) * max(a[3] - a[1], 0.0)
    area_b = max(b[2] - b[0], 0.0) * max(b[3] - b[1], 0.0)
    union = area_a + area_b - inter
    return inter / union if union > 0 else 0.0


def label_nms(ids_batch1, pboxes1, plabels1, pscores1, thr):
    ids_batch1 = np.asarray(ids_batch1)
    pboxes1 = np.asarray(pboxes1)
    plabels1 = np.asarray(plabels1)
    pscores1 = np.asarray(pscores1)
    order = np.argsort(-pscores1)
    suppressed = np.zeros(len(order), dtype=bool)
    keep = []
    for ii, i in enumerate(order):
        if suppressed[i]:
            continue
        keep.append(i)
        for j in order[ii + 1:]:
            if suppressed[j]:
                continue
            if ids_batch1[j] != ids_batch1[i] or plabels1[j] != plabels1[i]:
                continue
            if _iou_ltrb(pboxes1[i], pboxes1[j]) > thr:
                suppressed[j] = True
    keep = np.array(keep, dtype=np.int64)
    return ids_batch1[keep], pboxes1[keep], plabels1[keep], pscores1[keep]


# ------------------------------ forward (glue) -------------------------------
def predicting_forward(outs):
    pconf, pcls, ptxywh = outs                        # p_init equivalent

    # get_pscores (Pallas kernel): dense scores only; labels/boxes are decoded
    # sparsely below for the <= B*PTOPK survivors.
    pscores = predict_scores(pconf, pcls)

    mask_pos = pscores > THRESHOLD_PREDICT_CONF
    if not bool(jnp.any(mask_pos)):
        # sigmoid(conf) only needed on this rare debug branch -> computed lazily
        pconf_sig = jax.nn.sigmoid(pconf.astype(jnp.float32))
        print('该批次没有找到目标 max:{0:.2f} min:{1:.2f} mean:{2:.2f}'.format(
            float(pconf_sig.max()), float(pconf_sig.min()), float(pconf_sig.mean())))
        return [None] * 5

    if pscores.shape[-1] > PTOPK:
        _, ids_topk = jax.lax.top_k(pscores, PTOPK)           # torch.topk equivalent
        mask_topk = jnp.zeros_like(mask_pos)
        mask_topk = mask_topk.at[
            jnp.arange(ids_topk.shape[0])[:, None], ids_topk].set(True)
        mask_pos = jnp.logical_and(mask_pos, mask_topk)

    # get_stage_res: boolean gather of positives (dynamic shape -> eager glue).
    ids_b, ids_n = jnp.nonzero(mask_pos)
    ids_batch1 = ids_b

    # Sparse box decode (xywh -> ltrb) only for the survivors.
    # TODO(synk): assumes ptxywh is already absolute (cx,cy,w,h); if the
    # concrete subclass applies an anchor/variance decode, add it here.
    txywh1 = ptxywh[ids_b, :, ids_n].astype(jnp.float32)      # (K, 4)
    xy = txywh1[:, 0:2]
    half = txywh1[:, 2:4] * 0.5
    pboxes_ltrb1 = jnp.concatenate([xy - half, xy + half], axis=-1)

    # Sparse labels: argmax of raw class logits (== argmax of sigmoid), 1-based.
    cls1 = pcls[ids_b, :, ids_n].astype(jnp.float32)          # (K, C)
    plabels1 = jnp.argmax(cls1, axis=-1).astype(jnp.int32) + 1
    pscores1 = pscores[ids_b, ids_n]

    ids_batch2, p_boxes_ltrb2, p_labels2, p_scores2 = label_nms(
        ids_batch1, pboxes_ltrb1, plabels1, pscores1, THRESHOLD_PREDICT_NMS)
    return (ids_batch2, p_boxes_ltrb2, None, p_labels2, p_scores2)


# ----------------------------------- main ------------------------------------
if __name__ == "__main__":
    B, N, C = 2, 256, NUM_CLASSES
    key = jax.random.PRNGKey(0)
    k1, k2, k3, k4 = jax.random.split(key, 4)

    # Synthetic raw network head outputs (this module owns no learned weights).
    pconf = 2.0 * jax.random.normal(k1, (B, N), dtype=jnp.float32)
    pcls = 2.0 * jax.random.normal(k2, (B, C, N), dtype=jnp.float32)
    cxcy = 16.0 * jax.random.uniform(k3, (B, 2, N), dtype=jnp.float32)
    wh = 1.0 + 3.0 * jax.random.uniform(k4, (B, 2, N), dtype=jnp.float32)
    ptxywh = jnp.concatenate([cxcy, wh], axis=1)      # [B, 4, N]

    result = predicting_forward((pconf, pcls, ptxywh))
    for r in result:
        if r is not None and hasattr(r, "block_until_ready"):
            jax.block_until_ready(r)
    print("KERNEL_OK")
</pallas_src>

<mosaic_0001>
module attributes {stable_mosaic.version = 11 : i64} {
  func.func @_score_kernel(%arg0: i32, %arg1: i32, %arg2: memref<1x8x128xf32, #tpu.memory_space<vmem>>, %arg3: memref<1x4x8x128xf32, #tpu.memory_space<vmem>>, %arg4: memref<1x8x128xf32, #tpu.memory_space<vmem>>) attributes {dimension_semantics = [#tpu.dimension_semantics<parallel>, #tpu.dimension_semantics<parallel>], iteration_bounds = array<i64: 2, 1>, scalar_prefetch = 0 : i64, scratch_operands = 0 : i64, tpu.core_type = #tpu.core_type<tc>, window_params = [{transform_indices = @transform_0, window_bounds = array<i64: 1, 8, 128>}, {transform_indices = @transform_1, window_bounds = array<i64: 1, 4, 8, 128>}, {transform_indices = @transform_2, window_bounds = array<i64: 1, 8, 128>}]} {
    %c0 = arith.constant 0 : index
    %c0_0 = arith.constant 0 : index
    %c0_1 = arith.constant 0 : index
    %c0_2 = arith.constant 0 : index
    %0 = vector.load %arg3[%c0, %c0_0, %c0_1, %c0_2] : memref<1x4x8x128xf32, #tpu.memory_space<vmem>>, vector<1x4x8x128xf32>
    %1 = vector.shape_cast %0 : vector<1x4x8x128xf32> to vector<4x8x128xf32>
    %cst = arith.constant dense<0xFF800000> : vector<8x128xf32>
    %2 = vector.multi_reduction <maximumf>, %1, %cst [0] : vector<4x8x128xf32> to vector<8x128xf32>
    %c0_3 = arith.constant 0 : index
    %c0_4 = arith.constant 0 : index
    %c0_5 = arith.constant 0 : index
    %3 = vector.load %arg2[%c0_3, %c0_4, %c0_5] : memref<1x8x128xf32, #tpu.memory_space<vmem>>, vector<1x8x128xf32>
    %4 = vector.shape_cast %3 : vector<1x8x128xf32> to vector<8x128xf32>
    %5 = arith.negf %4 : vector<8x128xf32>
    %6 = math.exp %5 : vector<8x128xf32>
    %cst_6 = arith.constant 1.000000e+00 : f32
    %7 = vector.broadcast %cst_6 : f32 to vector<8x128xf32>
    %8 = arith.addf %7, %6 : vector<8x128xf32>
    %9 = arith.divf %7, %8 : vector<8x128xf32>
    %10 = arith.negf %2 : vector<8x128xf32>
    %11 = math.exp %10 : vector<8x128xf32>
    %cst_7 = arith.constant 1.000000e+00 : f32
    %12 = vector.broadcast %cst_7 : f32 to vector<8x128xf32>
    %13 = arith.addf %12, %11 : vector<8x128xf32>
    %14 = arith.divf %12, %13 : vector<8x128xf32>
    %15 = arith.mulf %9, %14 : vector<8x128xf32>
    %c0_8 = arith.constant 0 : index
    %c0_9 = arith.constant 0 : index
    %c0_10 = arith.constant 0 : index
    %16 = vector.load %arg4[%c0_8, %c0_9, %c0_10] : memref<1x8x128xf32, #tpu.memory_space<vmem>>, vector<1x8x128xf32>
    %17 = vector.shape_cast %16 : vector<1x8x128xf32> to vector<8x128xf32>
    %18 = vector.shape_cast %15 : vector<8x128xf32> to vector<1x8x128xf32>
    tpu.vector_store %arg4[%c0_8, %c0_9, %c0_10], %18 {strides = array<i32>} : memref<1x8x128xf32, #tpu.memory_space<vmem>>, vector<1x8x128xf32>,
    return
  }
  func.func @transform_0(%arg0: i32, %arg1: i32) -> (i32, i32, i32) {
    %c0_i32 = arith.constant 0 : i32
    %c0_i32_0 = arith.constant 0 : i32
    return %arg0, %arg1, %c0_i32 : i32, i32, i32
  }
  func.func @transform_1(%arg0: i32, %arg1: i32) -> (i32, i32, i32, i32) {
    %c0_i32 = arith.constant 0 : i32
    %c0_i32_0 = arith.constant 0 : i32
    %c0_i32_1 = arith.constant 0 : i32
    return %arg0, %c0_i32, %arg1, %c0_i32_0 : i32, i32, i32, i32
  }
  func.func @transform_2(%arg0: i32, %arg1: i32) -> (i32, i32, i32) {
    %c0_i32 = arith.constant 0 : i32
    %c0_i32_0 = arith.constant 0 : i32
    return %arg0, %arg1, %c0_i32 : i32, i32, i32
  }
}

</mosaic_0001>

<llo_original>
// kernel: tpu_custom_call.1
$region0: #{tpu_custom_call.1}
  #allocation0 [shape = 'u32[]', space=smem, size = 0x4, offset = 0x4, fixed_abs, tag = 'smem constant byte address 0x4 - core index']
  #allocation1 [shape = 'u32[144,128]{1,0:T(1,128)}', space=vmem, size = 0x12000, scoped, tag = 'internal scratch']
  %s0 = inlined_call_operand.hbm [shape: f32[2,8,128], index: 0, kind: input, shape index: {}]
  %s1 = inlined_call_operand.hbm [shape: f32[2,4,8,128], index: 1, kind: input, shape index: {}]
  %s2 = inlined_call_operand.hbm [shape: f32[2,8,128], index: 2, kind: output, shape index: {}]
  %s3 = sld [smem:[#allocation0]]
  $region49: #{tpu_custom_call.1} parent=0
    _
  %s5 = ssub.s32 1, %s3
  %s6 = scalar_select 0, %s5, %s3
  $region1: #{tpu_custom_call.1} parent=0
    #allocation2 [shape = 'u8[8192]{0}', space=vmem, size = 0x2000, scoped, tag = 'input window, operand 0']
    #allocation3 [shape = 's32[2]{0}', space=sflag, size = 0x8, scoped, tag = 'scoped memory for tpu_custom_call.1']
    #allocation4 [shape = 's32[2]{0}', space=sflag, size = 0x8, scoped, tag = 'scoped memory for tpu_custom_call.1']
    #allocation5 [shape = 'u8[32768]{0}', space=vmem, size = 0x8000, scoped, tag = 'input window, operand 1']
    #allocation6 [shape = 's32[2]{0}', space=sflag, size = 0x8, scoped, tag = 'scoped memory for tpu_custom_call.1']
    #allocation7 [shape = 'u8[8192]{0}', space=vmem, size = 0x2000, scoped, tag = 'output window, operand 0']
    %7 = vsyncpa [#allocation3], 0
    %s8 = scalar_lea.sflag [#allocation3], 1
    %9 = vsyncpa %s8, 0
    %10 = vsyncpa [#allocation6], 0
    %s11 = scalar_lea.sflag [#allocation6], 1
    %12 = vsyncpa %s11, 0
    %13 = vsyncpa [#allocation4], 0
    %s14 = scalar_lea.sflag [#allocation4], 1
    %15 = vsyncpa %s14, 0
    loop: start=0, step=1, limit=4
    $region2: #{tpu_custom_call.1} parent=1 // loop_pre_header
      _
    $region3: #{tpu_custom_call.1} parent=1 // loop_header
      %s17 = sphi 0, %s21
      %p18 = scmp.ge.s32.totalorder %s17, 4
      %s24 = sphi 0, %s36
      %s25 = sphi 0, %s32
      %s26 = sphi 0, %s24
      %s27 = sphi 0, %s25
      %s28 = sphi 0, %s26
      %s29 = sphi 0, %s27
      %s41 = sphi 0, %s43
      %s44 = sphi 0, %s41
      %s45 = sphi 0, %s44
      %s61 = sphi 0, %s45
      %s69 = sphi 0, %s71
      %s72 = sphi 0, %s69
      %s73 = sphi 0, %s72
      %s89 = sphi 0, %s73
      %s97 = sphi 0, %s99
      %s100 = sphi 0, %s97
      %s101 = sphi 0, %s100
      %s117 = sphi 0, %s101
    $region4: #{tpu_custom_call.1} parent=1 // loop_header_branch
      %20 = sbr.rel (%p18) target = $region8
    $region5: #{tpu_custom_call.1} parent=1 // loop_body
      %s22 = ssub.s32 %s17, 1
      %s23 = ssub.s32 %s17, 2
      %s30 = sadd.s32 1, %s25
      %p31 = scmp.ge.s32.totalorder %s30, 1
      %s32 = scalar_select %p31, 0, %s30
      %s33 = sadd.s32 1, %s24
      %s34 = scalar_select %p31, %s33, %s24
      %p35 = scmp.ge.s32.totalorder %s34, 2
      %s36 = scalar_select %p35, 0, %s34
      %s37 = ssub.s32 %s24, %s36
      %s38 = ssub.s32 %s25, %s32
      %s39 = sor.u32 %s37, %s38
      %p40 = scmp.eq.s32.totalorder %s39, 0
      %s42 = sadd.s32 %s41, 1
      %s43 = scalar_select %p40, %s41, %s42
      %p46 = pneg %p40
      %p47 = scmp.eq.s32.totalorder %s17, 1
      %p48 = por %p46, %p47
      %p49 = scmp.ne.s32.totalorder %s41, %s44
      %p50 = scmp.eq.s32.totalorder %s17, 0
      %p51 = por %p49, %p50
      %p52 = scmp.ne.s32.totalorder %s41, %s44
      %p53 = scmp.eq.s32.totalorder %s22, 1
      %p54 = por %p52, %p53
      %p55 = scmp.ne.s32.totalorder %s44, %s45
      %p56 = scmp.eq.s32.totalorder %s22, 0
      %p57 = por %p55, %p56
      %p58 = scmp.ne.s32.totalorder %s44, %s45
      %p59 = scmp.eq.s32.totalorder %s23, 1
      %p60 = por %p58, %p59
      %p62 = scmp.ne.s32.totalorder %s45, %s61
      %p63 = scmp.eq.s32.totalorder %s23, 0
      %p64 = por %p62, %p63
      %s65 = ssub.s32 %s24, %s36
      %s66 = ssub.s32 %s25, %s32
      %s67 = sor.u32 %s65, %s66
      %p68 = scmp.eq.s32.totalorder %s67, 0
      %s70 = sadd.s32 %s69, 1
      %s71 = scalar_select %p68, %s69, %s70
      %p74 = pneg %p68
      %p75 = scmp.eq.s32.totalorder %s17, 1
      %p76 = por %p74, %p75
      %p77 = scmp.ne.s32.totalorder %s69, %s72
      %p78 = scmp.eq.s32.totalorder %s17, 0
      %p79 = por %p77, %p78
      %p80 = scmp.ne.s32.totalorder %s69, %s72
      %p81 = scmp.eq.s32.totalorder %s22, 1
      %p82 = por %p80, %p81
      %p83 = scmp.ne.s32.totalorder %s72, %s73
      %p84 = scmp.eq.s32.totalorder %s22, 0
      %p85 = por %p83, %p84
      %p86 = scmp.ne.s32.totalorder %s72, %s73
      %p87 = scmp.eq.s32.totalorder %s23, 1
      %p88 = por %p86, %p87
      %p90 = scmp.ne.s32.totalorder %s73, %s89
      %p91 = scmp.eq.s32.totalorder %s23, 0
      %p92 = por %p90, %p91
      %s93 = ssub.s32 %s24, %s36
      %s94 = ssub.s32 %s25, %s32
      %s95 = sor.u32 %s93, %s94
      %p96 = scmp.eq.s32.totalorder %s95, 0
      %s98 = sadd.s32 %s97, 1
      %s99 = scalar_select %p96, %s97, %s98
      %p102 = pneg %p96
      %p103 = scmp.eq.s32.totalorder %s17, 1
      %p104 = por %p102, %p103
      %p105 = scmp.ne.s32.totalorder %s97, %s100
      %p106 = scmp.eq.s32.totalorder %s17, 0
      %p107 = por %p105, %p106
      %p108 = scmp.ne.s32.totalorder %s97, %s100
      %p109 = scmp.eq.s32.totalorder %s22, 1
      %p110 = por %p108, %p109
      %p111 = scmp.ne.s32.totalorder %s100, %s101
      %p112 = scmp.eq.s32.totalorder %s22, 0
      %p113 = por %p111, %p112
      %p114 = scmp.ne.s32.totalorder %s100, %s101
      %p115 = scmp.eq.s32.totalorder %s23, 1
      %p116 = por %p114, %p115
      %p118 = scmp.ne.s32.totalorder %s101, %s117
      %p119 = scmp.eq.s32.totalorder %s23, 0
      %p120 = por %p118, %p119
      %p121 = scmp.le.s32.totalorder 1, %s17
      %p122 = scmp.lt.s32.totalorder %s17, 3
      %p123 = pnand %p121, %p122
      %p124 = pneg %p123
      // Predicated region
      $region9: #{tpu_custom_call.1} parent=5 // pred_check
        _
      $region10: #{tpu_custom_call.1} parent=5 // pred_check_branch
        %126 = sbr.rel (%p123) target = $region12
      $region11: #{tpu_custom_call.1} parent=5 // pred_region
        %s127 = ssub.s32 %s17, 1
      $region12: #{tpu_custom_call.1} parent=5 // pred_fallthru
        _
      %p128 = scmp.lt.s32.totalorder %s17, 2
      // Predicated region
      $region13: #{tpu_custom_call.1} parent=5 // pred_check
        %p129 = pneg %p128
      $region14: #{tpu_custom_call.1} parent=5 // pred_check_branch
        %131 = sbr.rel (%p129) target = $region16
      $region15: #{tpu_custom_call.1} parent=5 // pred_region
        // Predicated region
        $region17: #{tpu_custom_call.1} parent=15 // pred_check
          %p132 = pneg %p51
        $region18: #{tpu_custom_call.1} parent=15 // pred_check_branch
          %134 = sbr.rel (%p132) target = $region20
        $region19: #{tpu_custom_call.1} parent=15 // pred_region
          %s135 = sand.u32 %s41, 1
          %s136 = scalar_lea.sflag [#allocation3], %s135
          %s137 = sand.u32 %s41, 1
          %s138 = smul.addr %s137, 8
          %s139 = scalar_lea.vmem [#allocation2], %s138
          %s141 = ssub.s32 128, 128
          %142 = vsyncadd %s136, %s141
          %s143 = sadd.s32 %s25, %s24
          %s144 = smul.addr %s143, 128
          %s145 = scalar_lea.hbm %s0, %s144
          %s147 = sshll.u32 %s139, 4
          %s148 = int_to_ptr.vmem [resolvable:$true] %s147
          %150 = dma.hbm_to_vmem [thread:$0]  %s145, 128, %s148, %s136
        $region20: #{tpu_custom_call.1} parent=15 // pred_fallthru
          _
        // Predicated region
        $region21: #{tpu_custom_call.1} parent=15 // pred_check
          %p151 = pneg %p79
        $region22: #{tpu_custom_call.1} parent=15 // pred_check_branch
          %153 = sbr.rel (%p151) target = $region24
        $region23: #{tpu_custom_call.1} parent=15 // pred_region
          %s154 = sand.u32 %s69, 1
          %s155 = scalar_lea.sflag [#allocation6], %s154
          %s156 = sand.u32 %s69, 1
          %s157 = smul.addr %s156, 32
          %s158 = scalar_lea.vmem [#allocation5], %s157
          %s160 = ssub.s32 512, 512
          %161 = vsyncadd %s155, %s160
          %s162 = smul.addr %s24, 4
          %s163 = sadd.s32 %s25, %s162
          %s164 = smul.addr %s163, 128
          %s165 = scalar_lea.hbm %s1, %s164
          %s166 = sshll.u32 %s158, 4
          %s167 = int_to_ptr.vmem [resolvable:$true] %s166
          %172 = dma.hbm_to_vmem [thread:$0]  %s165, 512, %s167, %s155, 128, 128, 8
        $region24: #{tpu_custom_call.1} parent=15 // pred_fallthru
          _
      $region16: #{tpu_custom_call.1} parent=5 // pred_fallthru
        _
      %p173 = scmp.le.s32.totalorder 1, %s17
      %p174 = scmp.lt.s32.totalorder %s17, 3
      %p175 = pnand %p173, %p174
      %p176 = pneg %p175
      // Predicated region
      $region25: #{tpu_custom_call.1} parent=5 // pred_check
        _
      $region26: #{tpu_custom_call.1} parent=5 // pred_check_branch
        %178 = sbr.rel (%p175) target = $region28
      $region27: #{tpu_custom_call.1} parent=5 // pred_region
        %s179 = ssub.s32 %s17, 1
        %s180 = sand.u32 %s44, 1
        %s181 = scalar_lea.sflag [#allocation3], %s180
        %s182 = sand.u32 %s44, 1
        %s183 = smul.addr %s182, 8
        %s184 = scalar_lea.vmem [#allocation2], %s183
        // Predicated region
        $region29: #{tpu_custom_call.1} parent=27 // pred_check
          %p185 = pneg %p57
        $region30: #{tpu_custom_call.1} parent=27 // pred_check_branch
          %187 = sbr.rel (%p185) target = $region32
        $region31: #{tpu_custom_call.1} parent=27 // pred_region
          %188 = dma.done %s181, 128
        $region32: #{tpu_custom_call.1} parent=27 // pred_fallthru
          _
        %s189 = sand.u32 %s72, 1
        %s190 = scalar_lea.sflag [#allocation6], %s189
        %s191 = sand.u32 %s72, 1
        %s192 = smul.addr %s191, 32
        %s193 = scalar_lea.vmem [#allocation5], %s192
        // Predicated region
        $region33: #{tpu_custom_call.1} parent=27 // pred_check
          %p194 = pneg %p85
        $region34: #{tpu_custom_call.1} parent=27 // pred_check_branch
          %196 = sbr.rel (%p194) target = $region36
        $region35: #{tpu_custom_call.1} parent=27 // pred_region
          %197 = dma.done %s190, 512
        $region36: #{tpu_custom_call.1} parent=27 // pred_fallthru
          _
        %s198 = sand.u32 %s44, 1
        %s199 = scalar_lea.sflag [#allocation3], %s198
        %s200 = sand.u32 %s44, 1
        %s201 = smul.addr %s200, 8
        %s202 = scalar_lea.vmem [#allocation2], %s201
        %p203 = pneg %p57
        %p204 = pneg %p54
        %s205 = sand.u32 %s72, 1
        %s206 = scalar_lea.sflag [#allocation6], %s205
        %s207 = sand.u32 %s72, 1
        %s208 = smul.addr %s207, 32
        %s209 = scalar_lea.vmem [#allocation5], %s208
        %p210 = pneg %p85
        %p211 = pneg %p82
        %p212 = pneg %p113
        %p213 = pneg %p110
        %s214 = sand.u32 %s100, 1
        %s215 = scalar_lea.sflag [#allocation4], %s214
        %s216 = sand.u32 %s100, 1
        %s217 = smul.addr %s216, 8
        %s218 = scalar_lea.vmem [#allocation7], %s217
        %v219 = vld [vmem:[%s193] sm:$0xff]
        %v220 = vld [vmem:[%s193 + $0x8] sm:$0xff]
        %v221 = vld [vmem:[%s193 + $0x10] sm:$0xff]
        %v222 = vld [vmem:[%s193 + $0x18] sm:$0xff]
        %v223 = vmax.f32 %v219, %v220
        %v224 = vmax.f32 %v221, %v222
        %v225 = vmax.f32 %v223, %v224
        %v226 = vld [vmem:[%s184] sm:$0xff]
        %v227 = vxor.u32 %v226, 2147483648
        %v228 = vmul.f32 %v227, 1.442695
        %v229 = vpow.pop %v228
        %v230 = vadd.f32 %v229, 1.0
        %v231 = vrcp.pop %v230
        %v232 = vmul.f32 1.0, %v231
        %v233 = vxor.u32 %v225, 2147483648
        %v234 = vmul.f32 %v233, 1.442695
        %v235 = vpow.pop %v234
        %v236 = vadd.f32 %v235, 1.0
        %v237 = vrcp.pop %v236
        %v238 = vmul.f32 1.0, %v237
        %v239 = vmul.f32 %v232, %v238
        %240 = vst [vmem:[%s218] sm:$0xff] %v239
        %s241 = sand.u32 %s100, 1
        %s242 = scalar_lea.sflag [#allocation4], %s241
        %s243 = sand.u32 %s100, 1
        %s244 = smul.addr %s243, 8
        %s245 = scalar_lea.vmem [#allocation7], %s244
        // Predicated region
        $region37: #{tpu_custom_call.1} parent=27 // pred_check
          %p246 = pneg %p110
        $region38: #{tpu_custom_call.1} parent=27 // pred_check_branch
          %248 = sbr.rel (%p246) target = $region40
        $region39: #{tpu_custom_call.1} parent=27 // pred_region
          %s250 = ssub.s32 128, 128
          %251 = vsyncadd %s242, %s250
          %s252 = sadd.s32 %s27, %s26
          %s253 = smul.addr %s252, 128
          %s254 = scalar_lea.hbm %s2, %s253
          %s256 = sshll.u32 %s245, 4
          %s257 = int_to_ptr.vmem [resolvable:$true] %s256
          %259 = dma.vmem_to_hbm [thread:$0]  %s257, 128, %s254, %s242
        $region40: #{tpu_custom_call.1} parent=27 // pred_fallthru
          _
      $region28: #{tpu_custom_call.1} parent=5 // pred_fallthru
        _
      %p260 = scmp.le.s32.totalorder 2, %s17
      // Predicated region
      $region41: #{tpu_custom_call.1} parent=5 // pred_check
        %p261 = pneg %p260
      $region42: #{tpu_custom_call.1} parent=5 // pred_check_branch
        %263 = sbr.rel (%p261) target = $region44
      $region43: #{tpu_custom_call.1} parent=5 // pred_region
        %s264 = ssub.s32 %s17, 2
        // Predicated region
        $region45: #{tpu_custom_call.1} parent=43 // pred_check
          %p265 = pneg %p116
        $region46: #{tpu_custom_call.1} parent=43 // pred_check_branch
          %267 = sbr.rel (%p265) target = $region48
        $region47: #{tpu_custom_call.1} parent=43 // pred_region
          %s268 = sand.u32 %s101, 1
          %s269 = scalar_lea.sflag [#allocation4], %s268
          %s270 = sand.u32 %s101, 1
          %s271 = smul.addr %s270, 8
          %s272 = scalar_lea.vmem [#allocation7], %s271
          %273 = dma.done %s269, 128
        $region48: #{tpu_custom_call.1} parent=43 // pred_fallthru
          _
      $region44: #{tpu_custom_call.1} parent=5 // pred_fallthru
        _
    $region6: #{tpu_custom_call.1} parent=1 // loop_footer
      %s21 = sadd.s32 1, %s17
    $region7: #{tpu_custom_call.1} parent=1 // loop_footer_branch
      %16 = sbr.rel target = $region3
    $region8: #{tpu_custom_call.1} parent=1 // loop_exit
      _
    %274 = vsyncpa [#allocation3], 1
    %s275 = scalar_lea.sflag [#allocation3], 1
    %276 = vsyncpa %s275, 1
    %277 = vsyncpa [#allocation6], 1
    %s278 = scalar_lea.sflag [#allocation6], 1
    %279 = vsyncpa %s278, 1
    %280 = vsyncpa [#allocation4], 1
    %s281 = scalar_lea.sflag [#allocation4], 1
    %282 = vsyncpa %s281, 1

</llo_original>
